<compile_context>
chip_gen: v5e
topology: v5e:2x2
jax: 0.10.0
libtpu: 0.0.40
codegen_flags: <defaults>
</compile_context>

<pallas_src>
import functools

import jax
import jax.numpy as jnp
from jax.experimental import pallas as pl
from jax.experimental.pallas import tpu as pltpu


# --------------------------------------------------------------------------
# Helpers
# --------------------------------------------------------------------------
def _round_up(x, m):
    return ((x + m - 1) // m) * m


def _largest_divisor_tile(size, quantum, cap):
    """Largest multiple of `quantum` that divides `size` and is <= cap.

    `size` is assumed to be a multiple of `quantum`; always returns >= quantum.
    """
    best = quantum
    t = quantum
    limit = min(size, max(cap, quantum))
    while t <= limit:
        if size % t == 0:
            best = t
        t += quantum
    return best


def _vmem_limit_bytes():
    # ~48 MiB on v7x (64 MiB physical per TC), ~96 MiB on v5e/v6e (128 MiB).
    try:
        phys = int(pltpu.get_tpu_info().vmem_capacity_bytes)
        return min((phys * 3) // 4, 100 * 1024 * 1024)
    except Exception:
        return 48 * 1024 * 1024


# --------------------------------------------------------------------------
# Kernel: one (tm, tn) output tile per grid step, full-K contraction.
# --------------------------------------------------------------------------
def _linear_kernel(x_ref, w_ref, b_ref, o_ref):
    # x_ref: (tm, K), w_ref: (K, tn) pre-transposed weight, b_ref: (1, tn)
    acc = jnp.dot(x_ref[...], w_ref[...], preferred_element_type=jnp.float32)
    o_ref[...] = (acc + b_ref[...]).astype(o_ref.dtype)


# --------------------------------------------------------------------------
# Wrapper
# --------------------------------------------------------------------------
@functools.partial(jax.jit, static_argnames=("tm", "tn"))
def linear_forward(x, weight, bias, *, tm=None, tn=None):
    """Equivalent of torch.nn.Linear(input_size, input_size).forward(x).

    x:      (B, F_in)     float32
    weight: (F_out, F_in) float32, PyTorch convention (out_features, in_features)
    bias:   (F_out,)      float32
    """
    B, F_in = x.shape
    F_out = weight.shape[0]

    # Pad everything to (8, 128)-aligned sizes: zero-padded K columns / rows
    # contribute nothing to the dot, padded output rows/cols are sliced off.
    B_pad = _round_up(B, 8)
    K = _round_up(F_in, 128)
    N = _round_up(F_out, 128)

    vmem_limit = _vmem_limit_bytes()
    budget = int(vmem_limit * 0.9)

    # tm: as large as possible (ideally the whole batch) so W streams from HBM
    # exactly once.  tn: lane-dense multiple of 128, up to 512.
    if tm is None:
        tm = _largest_divisor_tile(B_pad, 8, 512)
    if tn is None:
        tn = _largest_divisor_tile(N, 128, 512)

    def vmem_usage(tm_, tn_):
        # double-buffered x / W / bias inputs + double-buffered output tile (f32)
        return 4 * (2 * (tm_ * K + K * tn_ + tn_) + 2 * tm_ * tn_)

    while vmem_usage(tm, tn) > budget and (tn > 128 or tm > 8):
        if tn >= tm and tn > 128:
            tn = _largest_divisor_tile(N, 128, tn - 128)
        elif tm > 8:
            tm = _largest_divisor_tile(B_pad, 8, tm - 8)
        else:
            break
    # TODO(synk): if K alone exceeds the VMEM budget (F_in beyond ~16K f32),
    # reintroduce a K grid axis with an f32 accumulator; not needed here.

    # Keep at least 2 output tiles when possible so v7x's two TensorCores
    # both get work under the "parallel" dimension semantics.
    if (B_pad // tm) * (N // tn) == 1 and N >= 256:
        tn = _largest_divisor_tile(N, 128, N // 2)

    # Pre-transpose weight to (F_in, F_out) once in the wrapper (standard
    # (K, N) RHS -> no per-tile XLU transpose inside the kernel) and pad.
    w_t = jnp.pad(weight.T, ((0, K - F_in), (0, N - F_out)))
    x_p = jnp.pad(x, ((0, B_pad - B), (0, K - F_in)))
    b_p = jnp.pad(bias, (0, N - F_out)).reshape(1, N)

    cost = pl.CostEstimate(
        flops=2 * B_pad * K * N,
        transcendentals=0,
        bytes_accessed=4 * (B_pad * K + K * N + B_pad * N),
    )

    out = pl.pallas_call(
        _linear_kernel,
        out_shape=jax.ShapeDtypeStruct((B_pad, N), x.dtype),
        grid=(B_pad // tm, N // tn),
        in_specs=[
            pl.BlockSpec((tm, K), lambda i, j: (i, 0)),   # x tile (constant over j)
            pl.BlockSpec((K, tn), lambda i, j: (0, j)),   # W^T tile
            pl.BlockSpec((1, tn), lambda i, j: (0, j)),   # bias tile
        ],
        out_specs=pl.BlockSpec((tm, tn), lambda i, j: (i, j)),
        compiler_params=pltpu.CompilerParams(
            dimension_semantics=("parallel", "parallel"),
            vmem_limit_bytes=vmem_limit,
        ),
        cost_estimate=cost,
    )(x_p, w_t, b_p)

    if B_pad != B or N != F_out:
        out = out[:B, :F_out]
    return out


# --------------------------------------------------------------------------
# Self-test
# --------------------------------------------------------------------------
if __name__ == "__main__":
    key = jax.random.PRNGKey(0)
    keys = jax.random.split(key, 9)

    # --- Spec shape (SimpleModel(input_size=32), batch=8) ---
    B, F = 8, 32
    bound = 1.0 / jnp.sqrt(jnp.float32(F))
    x = jax.random.normal(keys[0], (B, F), dtype=jnp.float32)
    weight = jax.random.uniform(keys[1], (F, F), minval=-bound, maxval=bound,
                                dtype=jnp.float32)
    bias = jax.random.uniform(keys[2], (F,), minval=-bound, maxval=bound,
                              dtype=jnp.float32)
    out = jax.block_until_ready(linear_forward(x, weight, bias))
    ref = x @ weight.T + bias
    assert jnp.allclose(out, ref, atol=1e-5, rtol=1e-5), "spec-shape mismatch"

    # --- Tile-aligned, larger shape ---
    B2, F2 = 128, 256
    bound2 = 1.0 / jnp.sqrt(jnp.float32(F2))
    x2 = jax.random.normal(keys[3], (B2, F2), dtype=jnp.float32)
    weight2 = jax.random.uniform(keys[4], (F2, F2), minval=-bound2, maxval=bound2,
                                 dtype=jnp.float32)
    bias2 = jax.random.uniform(keys[5], (F2,), minval=-bound2, maxval=bound2,
                               dtype=jnp.float32)
    out2 = jax.block_until_ready(linear_forward(x2, weight2, bias2))
    ref2 = x2 @ weight2.T + bias2
    assert jnp.allclose(out2, ref2, atol=1e-4, rtol=1e-4), "aligned-shape mismatch"

    # --- Non-tile-aligned shape exercising the pad-then-tile path ---
    B3, F3 = 5, 50
    bound3 = 1.0 / jnp.sqrt(jnp.float32(F3))
    x3 = jax.random.normal(keys[6], (B3, F3), dtype=jnp.float32)
    weight3 = jax.random.uniform(keys[7], (F3, F3), minval=-bound3, maxval=bound3,
                                 dtype=jnp.float32)
    bias3 = jax.random.uniform(keys[8], (F3,), minval=-bound3, maxval=bound3,
                               dtype=jnp.float32)
    out3 = jax.block_until_ready(linear_forward(x3, weight3, bias3))
    ref3 = x3 @ weight3.T + bias3
    assert out3.shape == (B3, F3), "padded output not sliced back"
    assert jnp.allclose(out3, ref3, atol=1e-5, rtol=1e-5), "padded-shape mismatch"

    print("KERNEL_OK")
</pallas_src>

<mosaic_0001>
module attributes {stable_mosaic.version = 11 : i64} {
  func.func @_linear_kernel(%arg0: i32, %arg1: i32, %arg2: memref<8x128xf32, #tpu.memory_space<vmem>>, %arg3: memref<128x128xf32, #tpu.memory_space<vmem>>, %arg4: memref<1x128xf32, #tpu.memory_space<vmem>>, %arg5: memref<8x128xf32, #tpu.memory_space<vmem>>) attributes {dimension_semantics = [#tpu.dimension_semantics<parallel>, #tpu.dimension_semantics<parallel>], iteration_bounds = array<i64: 1, 1>, scalar_prefetch = 0 : i64, scratch_operands = 0 : i64, tpu.core_type = #tpu.core_type<tc>, window_params = [{transform_indices = @transform_0, window_bounds = array<i64: 8, 128>}, {transform_indices = @transform_1, window_bounds = array<i64: 128, 128>}, {transform_indices = @transform_2, window_bounds = array<i64: 1, 128>}, {transform_indices = @transform_3, window_bounds = array<i64: 8, 128>}]} {
    %c0 = arith.constant 0 : index
    %c0_0 = arith.constant 0 : index
    %0 = vector.load %arg2[%c0, %c0_0] : memref<8x128xf32, #tpu.memory_space<vmem>>, vector<8x128xf32>
    %c0_1 = arith.constant 0 : index
    %c0_2 = arith.constant 0 : index
    %1 = vector.load %arg3[%c0_1, %c0_2] : memref<128x128xf32, #tpu.memory_space<vmem>>, vector<128x128xf32>
    %cst = arith.constant dense<0.000000e+00> : vector<8x128xf32>
    %2 = tpu.matmul %0, %1, %cst {dimension_numbers = #tpu.dot_dimension_numbers<[1], [0], [0], [1], [0, 0, 1, 1], [], []>} : vector<8x128xf32>, vector<128x128xf32>, vector<8x128xf32> -> vector<8x128xf32>
    %c0_3 = arith.constant 0 : index
    %c0_4 = arith.constant 0 : index
    %3 = vector.load %arg4[%c0_3, %c0_4] : memref<1x128xf32, #tpu.memory_space<vmem>>, vector<1x128xf32>
    %4 = vector.broadcast %3 : vector<1x128xf32> to vector<8x128xf32>
    %5 = arith.addf %2, %4 : vector<8x128xf32>
    %c0_5 = arith.constant 0 : index
    %c0_6 = arith.constant 0 : index
    %6 = vector.load %arg5[%c0_5, %c0_6] : memref<8x128xf32, #tpu.memory_space<vmem>>, vector<8x128xf32>
    tpu.vector_store %arg5[%c0_5, %c0_6], %5 {strides = array<i32>} : memref<8x128xf32, #tpu.memory_space<vmem>>, vector<8x128xf32>,
    return
  }
  func.func @transform_0(%arg0: i32, %arg1: i32) -> (i32, i32) {
    %c0_i32 = arith.constant 0 : i32
    %c0_i32_0 = arith.constant 0 : i32
    return %arg0, %c0_i32 : i32, i32
  }
  func.func @transform_1(%arg0: i32, %arg1: i32) -> (i32, i32) {
    %c0_i32 = arith.constant 0 : i32
    %c0_i32_0 = arith.constant 0 : i32
    return %c0_i32, %arg1 : i32, i32
  }
  func.func @transform_2(%arg0: i32, %arg1: i32) -> (i32, i32) {
    %c0_i32 = arith.constant 0 : i32
    %c0_i32_0 = arith.constant 0 : i32
    return %c0_i32, %arg1 : i32, i32
  }
  func.func @transform_3(%arg0: i32, %arg1: i32) -> (i32, i32) {
    %c0_i32 = arith.constant 0 : i32
    return %arg0, %arg1 : i32, i32
  }
}

</mosaic_0001>

<llo_original>
// kernel: linear_forward.1
$region0: #{linear_forward.1}
  #allocation0 [shape = 'u32[]', space=smem, size = 0x4, offset = 0x4, fixed_abs, tag = 'smem constant byte address 0x4 - core index']
  #allocation1 [shape = 'u32[72,128]{1,0:T(1,128)}', space=vmem, size = 0x9000, scoped, tag = 'internal scratch']
  %s0 = inlined_call_operand.vmem [shape: f32[8,128], index: 0, kind: input, shape index: {}]
  %s1 = inlined_call_operand.vmem [shape: f32[128,128], index: 1, kind: input, shape index: {}]
  %s2 = inlined_call_operand.vmem [shape: f32[1,128], index: 2, kind: input, shape index: {}]
  %s3 = inlined_call_operand.hbm [shape: f32[8,128], index: 3, kind: output, shape index: {}]
  %s4 = sld [smem:[#allocation0]]
  $region22: #{linear_forward.1} parent=0
    _
  %s6 = ssub.s32 1, %s4
  %s7 = scalar_select 0, %s6, %s4
  $region1: #{linear_forward.1} parent=0
    #allocation2 [shape = 'u8[4096]{0}', space=vmem, size = 0x1000, scoped, tag = 'output window, operand 0, single buffered']
    #allocation3 [shape = 's32[1]{0}', space=sflag, size = 0x4, scoped, tag = 'scoped memory for linear_forward.1']
    %8 = vsyncpa [#allocation3], 0
    // Predicated region
    $region2: #{linear_forward.1} parent=1 // pred_check
      _
    $region3: #{linear_forward.1} parent=1 // pred_check_branch
      %10 = sbr.rel (0) target = $region5
    $region4: #{linear_forward.1} parent=1 // pred_region
      _
    $region5: #{linear_forward.1} parent=1 // pred_fallthru
      _
    // Predicated region
    $region6: #{linear_forward.1} parent=1 // pred_check
      _
    $region7: #{linear_forward.1} parent=1 // pred_check_branch
      %12 = sbr.rel (0) target = $region9
    $region8: #{linear_forward.1} parent=1 // pred_region
      _
    $region9: #{linear_forward.1} parent=1 // pred_fallthru
      _
    // Predicated region
    $region10: #{linear_forward.1} parent=1 // pred_check
      _
    $region11: #{linear_forward.1} parent=1 // pred_check_branch
      %14 = sbr.rel (0) target = $region13
    $region12: #{linear_forward.1} parent=1 // pred_region
      _
    $region13: #{linear_forward.1} parent=1 // pred_fallthru
      _
    %v15 = vld [vmem:[%s0] sm:$0xff]
    %v16 = vld [vmem:[%s1] sm:$0xff]
    %v17 = vld [vmem:[%s1 + $0x8] sm:$0xff]
    %v18 = vld [vmem:[%s1 + $0x10] sm:$0xff]
    %v19 = vld [vmem:[%s1 + $0x18] sm:$0xff]
    %v20 = vld [vmem:[%s1 + $0x20] sm:$0xff]
    %v21 = vld [vmem:[%s1 + $0x28] sm:$0xff]
    %v22 = vld [vmem:[%s1 + $0x30] sm:$0xff]
    %v23 = vld [vmem:[%s1 + $0x38] sm:$0xff]
    %v24 = vld [vmem:[%s1 + $0x40] sm:$0xff]
    %v25 = vld [vmem:[%s1 + $0x48] sm:$0xff]
    %v26 = vld [vmem:[%s1 + $0x50] sm:$0xff]
    %v27 = vld [vmem:[%s1 + $0x58] sm:$0xff]
    %v28 = vld [vmem:[%s1 + $0x60] sm:$0xff]
    %v29 = vld [vmem:[%s1 + $0x68] sm:$0xff]
    %v30 = vld [vmem:[%s1 + $0x70] sm:$0xff]
    %v31 = vld [vmem:[%s1 + $0x78] sm:$0xff]
    %v32 = vld [vmem:[%s2] sm:$0x1]
    %v34 = vperm.slane %v32, 0
    %36 = vmatpush.msra.mxu0 %v31
    %37 = vmatpush.msra.mxu0 %v30
    %38 = vmatpush.msra.mxu0 %v29
    %39 = vmatpush.msra.mxu0 %v28
    %40 = vmatpush.msra.mxu0 %v27
    %41 = vmatpush.msra.mxu0 %v26
    %42 = vmatpush.msra.mxu0 %v25
    %43 = vmatpush.msra.mxu0 %v24
    %44 = vmatpush.msra.mxu0 %v23
    %45 = vmatpush.msra.mxu0 %v22
    %46 = vmatpush.msra.mxu0 %v21
    %47 = vmatpush.msra.mxu0 %v20
    %48 = vmatpush.msra.mxu0 %v19
    %49 = vmatpush.msra.mxu0 %v18
    %50 = vmatpush.msra.mxu0 %v17
    %51 = vmatpush.msra.mxu0 %v16
    %52 = vmatmul.f32.gmra.mxu0 %v15
    %v53 = vpop.f32.mrf.mxu0
    %v54 = vadd.f32 %v34, %v53
    %55 = vdwg.mxu0
    %56 = vst [vmem:[#allocation2] sm:$0xff] %v54
    // Predicated region
    $region14: #{linear_forward.1} parent=1 // pred_check
      _
    $region15: #{linear_forward.1} parent=1 // pred_check_branch
      %58 = sbr.rel (0) target = $region17
    $region16: #{linear_forward.1} parent=1 // pred_region
      %60 = vsyncadd [#allocation3], 0
      %s62 = sshll.u32 [#allocation2], 4
      %s63 = int_to_ptr.vmem [resolvable:$true] %s62
      %s64 = sshll.u32 %s3, 4
      %s65 = int_to_ptr.hbm [resolvable:$true] %s64
      %67 = dma.vmem_to_hbm [thread:$0]  %s63, 128, %s65, [#allocation3]
    $region17: #{linear_forward.1} parent=1 // pred_fallthru
      _
    // Predicated region
    $region18: #{linear_forward.1} parent=1 // pred_check
      _
    $region19: #{linear_forward.1} parent=1 // pred_check_branch
      %69 = sbr.rel (0) target = $region21
    $region20: #{linear_forward.1} parent=1 // pred_region
      %71 = dma.done [#allocation3], 128
    $region21: #{linear_forward.1} parent=1 // pred_fallthru
      _
    %72 = vsyncpa [#allocation3], 1

</llo_original>
